<compile_context>
chip_gen: v6e
topology: v6e:2x2x1
jax: 0.10.0
libtpu: 0.0.40
codegen_flags: <defaults>
</compile_context>

<pallas_src>
import jax
import jax.numpy as jnp
from jax.experimental import pallas as pl
from jax.experimental.pallas import tpu as pltpu

LANE = 128     # vreg lane width
SUBLANE = 8    # vreg sublane count (f32)


def _round_up(n, m):
    return ((n + m - 1) // m) * m


def _qnet_kernel(x_ref, w1_ref, b1_ref, w2_ref, b2_ref, o_ref):
    # hidden = relu(x @ w1 + b1)   (tb, in_f) @ (in_f, Hp) -> (tb, Hp)
    h = jnp.dot(x_ref[...], w1_ref[...], preferred_element_type=jnp.float32)
    h = jnp.maximum(h + b1_ref[...], 0.0)          # (tb,Hp) + (1,Hp) broadcast
    # out = h @ w2 + b2            (tb, Hp) @ (Hp, out_f) -> (tb, out_f)
    o = jnp.dot(h, w2_ref[...], preferred_element_type=jnp.float32)
    o_ref[...] = (o + b2_ref[...]).astype(o_ref.dtype)


def pad_params(w1, b1, w2, b2):
    """One-time hoisted padding of the HIDDEN dim to a multiple of 128 lanes.

    Inputs follow the transposed-vs-PyTorch layout:
      w1: (in_features, hidden), b1: (1, hidden),
      w2: (hidden, out_features), b2: (1, out_features).
    The input-feature and output dims are left unpadded (they equal the full
    array dims in the BlockSpecs, which is legal and minimizes HBM traffic).
    """
    in_f, hid = w1.shape
    out_f = w2.shape[1]
    hp = _round_up(hid, LANE)
    w1p = jnp.zeros((in_f, hp), jnp.float32).at[:, :hid].set(w1.astype(jnp.float32))
    b1p = jnp.zeros((1, hp), jnp.float32).at[:, :hid].set(b1.astype(jnp.float32))
    w2p = jnp.zeros((hp, out_f), jnp.float32).at[:hid, :].set(w2.astype(jnp.float32))
    b2p = b2.astype(jnp.float32).reshape(1, out_f)
    return w1p, b1p, w2p, b2p


def linear_qnet_forward(x, padded_params, *, block_batch=2048):
    """Fused MLP forward, batch-tiled grid, VMEM-resident weights.

    x: (B, in_features) unpadded. padded_params: output of pad_params().
    Returns (B, out_features) exactly (no wrapper-side pad or slice ops).
    """
    w1p, b1p, w2p, b2p = padded_params
    B, in_f = x.shape
    hp = w1p.shape[1]
    out_f = w2p.shape[1]

    # Batch tile: multiple of the sublane count; for B > 8 guarantee >= 2 grid
    # steps so the "parallel" axis shards across both v7x TensorCores. The last
    # block may be partial (Pallas pads OOB reads / masks OOB writes).
    if B <= SUBLANE:
        tb = B                                     # single block == full dim (legal)
    else:
        tb = min(block_batch, _round_up(pl.cdiv(B, 2), SUBLANE))
    grid = (pl.cdiv(B, tb),)

    flops = 2 * B * (in_f * hp + hp * out_f)
    bytes_accessed = 4 * (x.size + w1p.size + b1p.size + w2p.size + b2p.size + B * out_f)

    return pl.pallas_call(
        _qnet_kernel,
        out_shape=jax.ShapeDtypeStruct((B, out_f), jnp.float32),
        grid=grid,
        in_specs=[
            pl.BlockSpec((tb, in_f), lambda i: (i, 0)),     # x streams over batch, unpadded
            pl.BlockSpec((in_f, hp), lambda i: (0, 0)),     # w1 resident
            pl.BlockSpec((1, hp), lambda i: (0, 0)),        # b1 resident
            pl.BlockSpec((hp, out_f), lambda i: (0, 0)),    # w2 resident
            pl.BlockSpec((1, out_f), lambda i: (0, 0)),     # b2 resident
        ],
        out_specs=pl.BlockSpec((tb, out_f), lambda i: (i, 0)),  # unpadded output
        compiler_params=pltpu.CompilerParams(
            dimension_semantics=("parallel",),              # megacore on v7x
        ),
        cost_estimate=pl.CostEstimate(
            flops=flops, transcendentals=0, bytes_accessed=bytes_accessed),
    )(x.astype(jnp.float32), w1p, b1p, w2p, b2p)


def init_params(key, input_size, hidden_size, output_size):
    """Deterministic init mimicking nn.Linear's U(-1/sqrt(fan_in), 1/sqrt(fan_in)).

    Returns UNPADDED params in the (in, out) layout; pad with pad_params()."""
    k1, k2, k3, k4 = jax.random.split(key, 4)
    bound1 = 1.0 / (input_size ** 0.5)
    bound2 = 1.0 / (hidden_size ** 0.5)
    w1 = jax.random.uniform(k1, (input_size, hidden_size), jnp.float32, -bound1, bound1)
    b1 = jax.random.uniform(k2, (1, hidden_size), jnp.float32, -bound1, bound1)
    w2 = jax.random.uniform(k3, (hidden_size, output_size), jnp.float32, -bound2, bound2)
    b2 = jax.random.uniform(k4, (1, output_size), jnp.float32, -bound2, bound2)
    return w1, b1, w2, b2


if __name__ == "__main__":
    # Small shapes consistent with the module (typical snake Q-net: 11 -> 32 -> 3).
    batch, input_size, hidden_size, output_size = 8, 11, 32, 3

    key = jax.random.PRNGKey(0)
    kx, kp, kx2 = jax.random.split(key, 3)
    x = jax.random.normal(kx, (batch, input_size), jnp.float32)
    w1, b1, w2, b2 = init_params(kp, input_size, hidden_size, output_size)
    padded = pad_params(w1, b1, w2, b2)   # one-time hoisted padding (hidden dim only)

    # --- small batch (single grid step) ---
    out = linear_qnet_forward(x, padded)
    jax.block_until_ready(out)
    ref = jnp.maximum(x @ w1 + b1, 0.0) @ w2 + b2
    assert out.shape == (batch, output_size)
    assert jnp.allclose(out, ref, atol=1e-5, rtol=1e-5)

    # --- larger, non-multiple batch: exercises the 2-step grid + partial last block ---
    big_batch = 1037
    xb = jax.random.normal(kx2, (big_batch, input_size), jnp.float32)
    out_b = linear_qnet_forward(xb, padded)
    jax.block_until_ready(out_b)
    ref_b = jnp.maximum(xb @ w1 + b1, 0.0) @ w2 + b2
    assert out_b.shape == (big_batch, output_size)
    assert jnp.allclose(out_b, ref_b, atol=1e-5, rtol=1e-5)

    # TODO(synk): Linear_QNet.save() is file I/O (torch.save) — not a kernel concern.
    print("KERNEL_OK")
</pallas_src>

<mosaic_0001>
module attributes {stable_mosaic.version = 11 : i64} {
  func.func @_qnet_kernel(%arg0: i32, %arg1: memref<8x11xf32, #tpu.memory_space<vmem>>, %arg2: memref<11x128xf32, #tpu.memory_space<vmem>>, %arg3: memref<1x128xf32, #tpu.memory_space<vmem>>, %arg4: memref<128x3xf32, #tpu.memory_space<vmem>>, %arg5: memref<1x3xf32, #tpu.memory_space<vmem>>, %arg6: memref<8x3xf32, #tpu.memory_space<vmem>>) attributes {dimension_semantics = [#tpu.dimension_semantics<parallel>], iteration_bounds = array<i64: 1>, scalar_prefetch = 0 : i64, scratch_operands = 0 : i64, tpu.core_type = #tpu.core_type<tc>, window_params = [{transform_indices = @transform_0, window_bounds = array<i64: 8, 11>}, {pipeline_mode = #tpu.pipeline_mode<synchronous>, transform_indices = @transform_1, window_bounds = array<i64: 11, 128>}, {pipeline_mode = #tpu.pipeline_mode<synchronous>, transform_indices = @transform_2, window_bounds = array<i64: 1, 128>}, {pipeline_mode = #tpu.pipeline_mode<synchronous>, transform_indices = @transform_3, window_bounds = array<i64: 128, 3>}, {pipeline_mode = #tpu.pipeline_mode<synchronous>, transform_indices = @transform_4, window_bounds = array<i64: 1, 3>}, {transform_indices = @transform_5, window_bounds = array<i64: 8, 3>}]} {
    %c0 = arith.constant 0 : index
    %c0_0 = arith.constant 0 : index
    %0 = vector.load %arg1[%c0, %c0_0] : memref<8x11xf32, #tpu.memory_space<vmem>>, vector<8x11xf32>
    %c0_1 = arith.constant 0 : index
    %c0_2 = arith.constant 0 : index
    %1 = vector.load %arg2[%c0_1, %c0_2] : memref<11x128xf32, #tpu.memory_space<vmem>>, vector<11x128xf32>
    %cst = arith.constant dense<0.000000e+00> : vector<8x128xf32>
    %2 = tpu.matmul %0, %1, %cst {dimension_numbers = #tpu.dot_dimension_numbers<[1], [0], [0], [1], [0, 0, 1, 1], [], []>} : vector<8x11xf32>, vector<11x128xf32>, vector<8x128xf32> -> vector<8x128xf32>
    %c0_3 = arith.constant 0 : index
    %c0_4 = arith.constant 0 : index
    %3 = vector.load %arg3[%c0_3, %c0_4] : memref<1x128xf32, #tpu.memory_space<vmem>>, vector<1x128xf32>
    %4 = vector.broadcast %3 : vector<1x128xf32> to vector<8x128xf32>
    %5 = arith.addf %2, %4 : vector<8x128xf32>
    %cst_5 = arith.constant 0.000000e+00 : f32
    %6 = vector.broadcast %cst_5 : f32 to vector<8x128xf32>
    %7 = arith.maximumf %5, %6 : vector<8x128xf32>
    %c0_6 = arith.constant 0 : index
    %c0_7 = arith.constant 0 : index
    %8 = vector.load %arg4[%c0_6, %c0_7] : memref<128x3xf32, #tpu.memory_space<vmem>>, vector<128x3xf32>
    %cst_8 = arith.constant dense<0.000000e+00> : vector<8x3xf32>
    %9 = tpu.matmul %7, %8, %cst_8 {dimension_numbers = #tpu.dot_dimension_numbers<[1], [0], [0], [1], [0, 0, 1, 1], [], []>} : vector<8x128xf32>, vector<128x3xf32>, vector<8x3xf32> -> vector<8x3xf32>
    %c0_9 = arith.constant 0 : index
    %c0_10 = arith.constant 0 : index
    %10 = vector.load %arg5[%c0_9, %c0_10] : memref<1x3xf32, #tpu.memory_space<vmem>>, vector<1x3xf32>
    %11 = vector.broadcast %10 : vector<1x3xf32> to vector<8x3xf32>
    %12 = arith.addf %9, %11 : vector<8x3xf32>
    %c0_11 = arith.constant 0 : index
    %c0_12 = arith.constant 0 : index
    %13 = vector.load %arg6[%c0_11, %c0_12] : memref<8x3xf32, #tpu.memory_space<vmem>>, vector<8x3xf32>
    tpu.vector_store %arg6[%c0_11, %c0_12], %12 {strides = array<i32>} : memref<8x3xf32, #tpu.memory_space<vmem>>, vector<8x3xf32>,
    return
  }
  func.func @transform_0(%arg0: i32) -> (i32, i32) {
    %c0_i32 = arith.constant 0 : i32
    %c0_i32_0 = arith.constant 0 : i32
    return %arg0, %c0_i32 : i32, i32
  }
  func.func @transform_1(%arg0: i32) -> (i32, i32) {
    %c0_i32 = arith.constant 0 : i32
    %c0_i32_0 = arith.constant 0 : i32
    %c0_i32_1 = arith.constant 0 : i32
    return %c0_i32, %c0_i32_0 : i32, i32
  }
  func.func @transform_2(%arg0: i32) -> (i32, i32) {
    %c0_i32 = arith.constant 0 : i32
    %c0_i32_0 = arith.constant 0 : i32
    %c0_i32_1 = arith.constant 0 : i32
    return %c0_i32, %c0_i32_0 : i32, i32
  }
  func.func @transform_3(%arg0: i32) -> (i32, i32) {
    %c0_i32 = arith.constant 0 : i32
    %c0_i32_0 = arith.constant 0 : i32
    %c0_i32_1 = arith.constant 0 : i32
    return %c0_i32, %c0_i32_0 : i32, i32
  }
  func.func @transform_4(%arg0: i32) -> (i32, i32) {
    %c0_i32 = arith.constant 0 : i32
    %c0_i32_0 = arith.constant 0 : i32
    %c0_i32_1 = arith.constant 0 : i32
    return %c0_i32, %c0_i32_0 : i32, i32
  }
  func.func @transform_5(%arg0: i32) -> (i32, i32) {
    %c0_i32 = arith.constant 0 : i32
    %c0_i32_0 = arith.constant 0 : i32
    return %arg0, %c0_i32 : i32, i32
  }
}

</mosaic_0001>

<llo_original>
// kernel: tpu_custom_call.1
$region0: #{tpu_custom_call.1}
  #allocation0 [shape = 'u32[]', space=smem, size = 0x4, offset = 0x4, fixed_abs, tag = 'smem constant byte address 0x4 - core index']
  #allocation1 [shape = 'u32[144,128]{1,0:T(1,128)}', space=vmem, size = 0x12000, scoped, tag = 'internal scratch']
  %s0 = inlined_call_operand.vmem [shape: f32[8,11], index: 0, kind: input, shape index: {}]
  %s1 = inlined_call_operand.vmem [shape: f32[11,128], index: 1, kind: input, shape index: {}]
  %s2 = inlined_call_operand.vmem [shape: f32[1,128], index: 2, kind: input, shape index: {}]
  %s3 = inlined_call_operand.vmem [shape: f32[128,3], index: 3, kind: input, shape index: {}]
  %s4 = inlined_call_operand.vmem [shape: f32[1,3], index: 4, kind: input, shape index: {}]
  %s5 = inlined_call_operand.vmem [shape: f32[8,3], index: 5, kind: output, shape index: {}]
  %s6 = sld [smem:[#allocation0]]
  $region30: #{tpu_custom_call.1} parent=0
    _
  %s8 = ssub.s32 1, %s6
  %s9 = scalar_select 0, %s8, %s6
  // Predicated region
  $region2: #{tpu_custom_call.1} parent=0 // pred_check
    _
  $region3: #{tpu_custom_call.1} parent=0 // pred_check_branch
    %11 = sbr.rel (0) target = $region5
  $region4: #{tpu_custom_call.1} parent=0 // pred_region
    _
  $region5: #{tpu_custom_call.1} parent=0 // pred_fallthru
    _
  // Predicated region
  $region6: #{tpu_custom_call.1} parent=0 // pred_check
    _
  $region7: #{tpu_custom_call.1} parent=0 // pred_check_branch
    %13 = sbr.rel (0) target = $region9
  $region8: #{tpu_custom_call.1} parent=0 // pred_region
    _
  $region9: #{tpu_custom_call.1} parent=0 // pred_fallthru
    _
  // Predicated region
  $region10: #{tpu_custom_call.1} parent=0 // pred_check
    _
  $region11: #{tpu_custom_call.1} parent=0 // pred_check_branch
    %15 = sbr.rel (0) target = $region13
  $region12: #{tpu_custom_call.1} parent=0 // pred_region
    _
  $region13: #{tpu_custom_call.1} parent=0 // pred_fallthru
    _
  // Predicated region
  $region14: #{tpu_custom_call.1} parent=0 // pred_check
    _
  $region15: #{tpu_custom_call.1} parent=0 // pred_check_branch
    %17 = sbr.rel (0) target = $region17
  $region16: #{tpu_custom_call.1} parent=0 // pred_region
    _
  $region17: #{tpu_custom_call.1} parent=0 // pred_fallthru
    _
  // Predicated region
  $region18: #{tpu_custom_call.1} parent=0 // pred_check
    _
  $region19: #{tpu_custom_call.1} parent=0 // pred_check_branch
    %19 = sbr.rel (0) target = $region21
  $region20: #{tpu_custom_call.1} parent=0 // pred_region
    _
  $region21: #{tpu_custom_call.1} parent=0 // pred_fallthru
    _
  %v20 = vld [vmem:[%s0] sm:$0xff]
  %v21 = vld [vmem:[%s1] sm:$0xff]
  %v22 = vld [vmem:[%s1 + $0x8] sm:$0x7]
  %v23 = vld [vmem:[%s2] sm:$0x1]
  %v25 = vlaneseq
  %v26 = vshrl.u32 %v25, 7
  %v27 = vsub.s32 0, %v26
  %v28 = vrot.slane %v23, %v27
  %vm30 = vcmask 89088
  %v32 = vsel %vm30, %v20, 0
  %vm34 = vcmask 1042432
  %v36 = vsel %vm34, %v22, 0
  %38 = vmatprep.subr.mxu0 0.0
  %39 = vmatpush1.msra.mxu0 0.0
  %40 = vmatprep.subr.mxu0 0.0
  %41 = vmatpush1.msra.mxu0 0.0
  %42 = vmatprep.subr.mxu0 0.0
  %43 = vmatpush1.msra.mxu0 0.0
  %44 = vmatprep.subr.mxu0 0.0
  %45 = vmatpush1.msra.mxu0 0.0
  %46 = vmatprep.subr.mxu0 0.0
  %47 = vmatpush1.msra.mxu0 0.0
  %48 = vmatprep.subr.mxu0 0.0
  %49 = vmatpush1.msra.mxu0 0.0
  %50 = vmatprep.subr.mxu0 0.0
  %51 = vmatpush1.msra.mxu0 0.0
  %52 = vmatprep.subr.mxu0 0.0
  %53 = vmatpush1.msra.mxu0 0.0
  %54 = vmatprep.subr.mxu0 0.0
  %55 = vmatpush1.msra.mxu0 0.0
  %56 = vmatprep.subr.mxu0 0.0
  %57 = vmatpush1.msra.mxu0 0.0
  %58 = vmatprep.subr.mxu0 0.0
  %59 = vmatpush1.msra.mxu0 0.0
  %60 = vmatprep.subr.mxu0 0.0
  %61 = vmatpush1.msra.mxu0 0.0
  %62 = vmatprep.subr.mxu0 0.0
  %63 = vmatpush1.msra.mxu0 0.0
  %64 = vmatprep.subr.mxu0 0.0
  %65 = vmatpush1.msra.mxu0 0.0
  %66 = vmatprep.subr.mxu0 0.0
  %67 = vmatpush1.msra.mxu0 %v36
  %68 = vmatprep.subr.mxu0 0.0
  %69 = vmatpush1.msra.mxu0 %v21
  %70 = vmatprep.subr.mxu0 0.0
  %71 = vmatpush2.msra.mxu0 0.0
  %72 = vmatprep.subr.mxu0 0.0
  %73 = vmatpush2.msra.mxu0 0.0
  %74 = vmatprep.subr.mxu0 0.0
  %75 = vmatpush2.msra.mxu0 0.0
  %76 = vmatprep.subr.mxu0 0.0
  %77 = vmatpush2.msra.mxu0 0.0
  %78 = vmatprep.subr.mxu0 0.0
  %79 = vmatpush2.msra.mxu0 0.0
  %80 = vmatprep.subr.mxu0 0.0
  %81 = vmatpush2.msra.mxu0 0.0
  %82 = vmatprep.subr.mxu0 0.0
  %83 = vmatpush2.msra.mxu0 0.0
  %84 = vmatprep.subr.mxu0 0.0
  %85 = vmatpush2.msra.mxu0 0.0
  %86 = vmatprep.subr.mxu0 0.0
  %87 = vmatpush2.msra.mxu0 0.0
  %88 = vmatprep.subr.mxu0 0.0
  %89 = vmatpush2.msra.mxu0 0.0
  %90 = vmatprep.subr.mxu0 0.0
  %91 = vmatpush2.msra.mxu0 0.0
  %92 = vmatprep.subr.mxu0 0.0
  %93 = vmatpush2.msra.mxu0 0.0
  %94 = vmatprep.subr.mxu0 0.0
  %95 = vmatpush2.msra.mxu0 0.0
  %96 = vmatprep.subr.mxu0 0.0
  %97 = vmatpush2.msra.mxu0 0.0
  %98 = vmatprep.subr.mxu0 0.0
  %99 = vmatpush2.msra.mxu0 0.0
  %100 = vmatprep.subr.mxu0 0.0
  %101 = vmatpush2.msra.mxu0 0.0
  %102 = vmatprep.mubr.f32.mxu0 0.0
  %103 = vmatmul.mubr.f32.gmra.mxu0 %v32
  %v104 = vpop.f32.mrf.mxu0
  %v105 = vadd.f32 %v28, %v104
  %v106 = vpop.f32.mrf.mxu0
  %107 = vdwg.mxu0
  %v108 = vmax.f32 %v105, 0.0
  %v109 = vld [vmem:[%s3] sm:$0xff]
  %v110 = vld [vmem:[%s3 + $0x8] sm:$0xff]
  %v111 = vld [vmem:[%s3 + $0x10] sm:$0xff]
  %v112 = vld [vmem:[%s3 + $0x18] sm:$0xff]
  %v113 = vld [vmem:[%s3 + $0x20] sm:$0xff]
  %v114 = vld [vmem:[%s3 + $0x28] sm:$0xff]
  %v115 = vld [vmem:[%s3 + $0x30] sm:$0xff]
  %v116 = vld [vmem:[%s3 + $0x38] sm:$0xff]
  %v117 = vld [vmem:[%s3 + $0x40] sm:$0xff]
  %v118 = vld [vmem:[%s3 + $0x48] sm:$0xff]
  %v119 = vld [vmem:[%s3 + $0x50] sm:$0xff]
  %v120 = vld [vmem:[%s3 + $0x58] sm:$0xff]
  %v121 = vld [vmem:[%s3 + $0x60] sm:$0xff]
  %v122 = vld [vmem:[%s3 + $0x68] sm:$0xff]
  %v123 = vld [vmem:[%s3 + $0x70] sm:$0xff]
  %v124 = vld [vmem:[%s3 + $0x78] sm:$0xff]
  %v125 = vld [vmem:[%s4] sm:$0x1]
  %v127 = vlaneseq
  %v128 = vshrl.u32 %v127, 7
  %v129 = vsub.s32 0, %v128
  %v130 = vrot.slane %v125, %v129
  %132 = vmatprep.subr.mxu0 0.0
  %133 = vmatpush1.msra.mxu0 %v124
  %134 = vmatprep.subr.mxu0 0.0
  %135 = vmatpush1.msra.mxu0 %v123
  %136 = vmatprep.subr.mxu0 0.0
  %137 = vmatpush1.msra.mxu0 %v122
  %138 = vmatprep.subr.mxu0 0.0
  %139 = vmatpush1.msra.mxu0 %v121
  %140 = vmatprep.subr.mxu0 0.0
  %141 = vmatpush1.msra.mxu0 %v120
  %142 = vmatprep.subr.mxu0 0.0
  %143 = vmatpush1.msra.mxu0 %v119
  %144 = vmatprep.subr.mxu0 0.0
  %145 = vmatpush1.msra.mxu0 %v118
  %146 = vmatprep.subr.mxu0 0.0
  %147 = vmatpush1.msra.mxu0 %v117
  %148 = vmatprep.subr.mxu0 0.0
  %149 = vmatpush1.msra.mxu0 %v116
  %150 = vmatprep.subr.mxu0 0.0
  %151 = vmatpush1.msra.mxu0 %v115
  %152 = vmatprep.subr.mxu0 0.0
  %153 = vmatpush1.msra.mxu0 %v114
  %154 = vmatprep.subr.mxu0 0.0
  %155 = vmatpush1.msra.mxu0 %v113
  %156 = vmatprep.subr.mxu0 0.0
  %157 = vmatpush1.msra.mxu0 %v112
  %158 = vmatprep.subr.mxu0 0.0
  %159 = vmatpush1.msra.mxu0 %v111
  %160 = vmatprep.subr.mxu0 0.0
  %161 = vmatpush1.msra.mxu0 %v110
  %162 = vmatprep.subr.mxu0 0.0
  %163 = vmatpush1.msra.mxu0 %v109
  %164 = vmatprep.subr.mxu0 0.0
  %165 = vmatpush2.msra.mxu0 0.0
  %166 = vmatprep.subr.mxu0 0.0
  %167 = vmatpush2.msra.mxu0 0.0
  %168 = vmatprep.subr.mxu0 0.0
  %169 = vmatpush2.msra.mxu0 0.0
  %170 = vmatprep.subr.mxu0 0.0
  %171 = vmatpush2.msra.mxu0 0.0
  %172 = vmatprep.subr.mxu0 0.0
  %173 = vmatpush2.msra.mxu0 0.0
  %174 = vmatprep.subr.mxu0 0.0
  %175 = vmatpush2.msra.mxu0 0.0
  %176 = vmatprep.subr.mxu0 0.0
  %177 = vmatpush2.msra.mxu0 0.0
  %178 = vmatprep.subr.mxu0 0.0
  %179 = vmatpush2.msra.mxu0 0.0
  %180 = vmatprep.subr.mxu0 0.0
  %181 = vmatpush2.msra.mxu0 0.0
  %182 = vmatprep.subr.mxu0 0.0
  %183 = vmatpush2.msra.mxu0 0.0
  %184 = vmatprep.subr.mxu0 0.0
  %185 = vmatpush2.msra.mxu0 0.0
  %186 = vmatprep.subr.mxu0 0.0
  %187 = vmatpush2.msra.mxu0 0.0
  %188 = vmatprep.subr.mxu0 0.0
  %189 = vmatpush2.msra.mxu0 0.0
  %190 = vmatprep.subr.mxu0 0.0
  %191 = vmatpush2.msra.mxu0 0.0
  %192 = vmatprep.subr.mxu0 0.0
  %193 = vmatpush2.msra.mxu0 0.0
  %194 = vmatprep.subr.mxu0 0.0
  %195 = vmatpush2.msra.mxu0 0.0
  %196 = vmatprep.mubr.f32.mxu0 0.0
  %197 = vmatmul.mubr.f32.gmra.mxu0 %v108
  %v198 = vpop.f32.mrf.mxu0
  %v199 = vadd.f32 %v130, %v198
  %v200 = vpop.f32.mrf.mxu0
  %201 = vdwg.mxu0
  %vm202 = vcmask 23552
  %203 = vst.msk [vmem:[%s5] sm:$0xff] %vm202, %v199
  // Predicated region
  $region22: #{tpu_custom_call.1} parent=0 // pred_check
    _
  $region23: #{tpu_custom_call.1} parent=0 // pred_check_branch
    %205 = sbr.rel (0) target = $region25
  $region24: #{tpu_custom_call.1} parent=0 // pred_region
    _
  $region25: #{tpu_custom_call.1} parent=0 // pred_fallthru
    _
  // Predicated region
  $region26: #{tpu_custom_call.1} parent=0 // pred_check
    _
  $region27: #{tpu_custom_call.1} parent=0 // pred_check_branch
    %207 = sbr.rel (0) target = $region29
  $region28: #{tpu_custom_call.1} parent=0 // pred_region
    _
  $region29: #{tpu_custom_call.1} parent=0 // pred_fallthru
    _

</llo_original>
